<compile_context>
chip_gen: v5e
topology: v5e:2x2
jax: 0.10.0
libtpu: 0.0.40
codegen_flags: <defaults>
</compile_context>

<pallas_src>
import functools

import jax
import jax.numpy as jnp
from jax.experimental import pallas as pl
from jax.experimental.pallas import tpu as pltpu


def _round_up(x: int, m: int) -> int:
    return ((x + m - 1) // m) * m


def _make_integrand_kernel(n_layers: int):
    """Fused-MLP kernel.

    Kernel args: (x_ref, h_ref, w0x, w0h, b0, w1, b1, ..., out_ref)
    Hidden layers use ReLU; the final layer uses ELU fused with the module's
    trailing "+ 1.0".
    """

    def _activate(z, is_last):
        if is_last:
            # ELU(z) + 1.0  ==  z + 1 if z > 0 else exp(z)
            return jnp.where(z > 0.0, z + 1.0, jnp.exp(z))
        return jnp.maximum(z, 0.0)

    def kernel(x_ref, h_ref, *refs):
        out_ref = refs[-1]
        p = refs[:-1]  # (w0x, w0h, b0, w1, b1, ..., w_{L-1}, b_{L-1})

        # Layer 0: split-weight matmul avoids the HBM concat of [x, h].
        # bf16 (or f32) operands go straight to the MXU; accumulate in f32.
        z = (jnp.dot(x_ref[...], p[0][...], preferred_element_type=jnp.float32)
             + jnp.dot(h_ref[...], p[1][...], preferred_element_type=jnp.float32)
             + p[2][...])
        z = _activate(z, n_layers == 1)

        for i in range(1, n_layers):
            w = p[3 + 2 * (i - 1)][...]
            b = p[4 + 2 * (i - 1)][...]          # f32, shape (1, out)
            z = jnp.dot(z.astype(w.dtype), w,
                        preferred_element_type=jnp.float32) + b
            z = _activate(z, i == n_layers - 1)

        out_ref[...] = z.astype(out_ref.dtype)

    return kernel


def init_integrand_params(key, in_d, hidden_layers):
    """Deterministic init matching nn.Linear shapes (stored as [in, out])."""
    hs = [in_d] + list(hidden_layers) + [1]
    params = []
    for h0, h1 in zip(hs, hs[1:]):
        key, kw, kb = jax.random.split(key, 3)
        bound = 1.0 / jnp.sqrt(jnp.float32(h0))
        w = jax.random.uniform(kw, (h0, h1), jnp.float32, -bound, bound)
        b = jax.random.uniform(kb, (1, h1), jnp.float32, -bound, bound)
        params.append((w, b))
    return params


@functools.partial(jax.jit, static_argnames=("n_layers", "tile_b"))
def _integrand_pallas(x, h, flat_params, n_layers, tile_b):
    B, dx = x.shape
    dh = h.shape[1]
    kernel = _make_integrand_kernel(n_layers)

    # Weights/biases: full-shape blocks, constant index map -> VMEM-resident.
    param_specs = [pl.BlockSpec(p.shape, lambda i: (0, 0)) for p in flat_params]

    return pl.pallas_call(
        kernel,
        out_shape=jax.ShapeDtypeStruct((B, 1), jnp.float32),
        grid=(B // tile_b,),
        in_specs=[
            pl.BlockSpec((tile_b, dx), lambda i: (i, 0)),
            pl.BlockSpec((tile_b, dh), lambda i: (i, 0)),
        ] + param_specs,
        out_specs=pl.BlockSpec((tile_b, 1), lambda i: (i, 0)),
        compiler_params=pltpu.CompilerParams(
            dimension_semantics=("parallel",)),
    )(x, h, *flat_params)


def integrand_nn_forward(params, x, h, *, compute_dtype=jnp.float32,
                         tile_b=1024):
    """IntegrandNN.forward: net(cat([x, h], 1)) + 1.0, fully fused in Pallas.

    compute_dtype: dtype fed to the MXU for activations/weights (use
    jnp.bfloat16 on v6e/v7x to halve HBM traffic). Biases, accumulation and
    all element-wise math stay float32.
    """
    B, dx = x.shape

    # Split W0 so the kernel computes x @ W0x + h @ W0h (no HBM concat).
    (w0, b0), rest = params[0], params[1:]
    flat = [w0[:dx].astype(compute_dtype), w0[dx:].astype(compute_dtype),
            b0.astype(jnp.float32)]
    for w, b in rest:
        flat.extend([w.astype(compute_dtype), b.astype(jnp.float32)])

    # Batch tiling: multiple-of-8 sublane tile; pad B up, slice result back.
    tb = min(tile_b, _round_up(B, 16 if compute_dtype == jnp.bfloat16 else 8))
    pB = _round_up(B, tb)
    xc = x.astype(compute_dtype)
    hc = h.astype(compute_dtype)
    if pB != B:
        xc = jnp.pad(xc, ((0, pB - B), (0, 0)))
        hc = jnp.pad(hc, ((0, pB - B), (0, 0)))

    out = _integrand_pallas(xc, hc, tuple(flat),
                            n_layers=len(params), tile_b=tb)
    return out[:B]


def _reference_forward(params, x, h):
    z = jnp.concatenate([x, h], axis=1)
    n = len(params)
    for i, (w, b) in enumerate(params):
        z = z @ w + b
        if i < n - 1:
            z = jnp.maximum(z, 0.0)
        else:
            z = jnp.where(z > 0.0, z, jnp.exp(z) - 1.0) + 1.0
    return z


if __name__ == "__main__":
    # Small shapes consistent with the module: in_d = dx + dh = 4,
    # hidden_layers = [32, 32], batch = 8.
    B, dx, dh = 8, 1, 3
    in_d = dx + dh
    hidden_layers = [32, 32]

    key = jax.random.PRNGKey(0)
    kp, kx, kh = jax.random.split(key, 3)

    params = init_integrand_params(kp, in_d, hidden_layers)
    x = jax.random.normal(kx, (B, dx), jnp.float32)
    h = jax.random.normal(kh, (B, dh), jnp.float32)

    # f32 path: exact vs. pure-JAX reference.
    ref = _reference_forward(params, x, h)
    out = jax.block_until_ready(integrand_nn_forward(params, x, h))
    assert out.shape == (B, 1)
    assert jnp.allclose(out, ref, atol=1e-5, rtol=1e-5), (out, ref)

    # bf16 MXU path + ragged batch (B=11 exercises padding to the tile).
    B2 = 11
    kx2, kh2 = jax.random.split(jax.random.PRNGKey(1))
    x2 = jax.random.normal(kx2, (B2, dx), jnp.float32)
    h2 = jax.random.normal(kh2, (B2, dh), jnp.float32)
    ref2 = _reference_forward(params, x2, h2)
    out2 = jax.block_until_ready(
        integrand_nn_forward(params, x2, h2, compute_dtype=jnp.bfloat16))
    assert out2.shape == (B2, 1)
    assert jnp.allclose(out2, ref2, atol=1e-1, rtol=1e-1), (out2, ref2)

    print("KERNEL_OK")
</pallas_src>

<mosaic_0001>
module attributes {stable_mosaic.version = 11 : i64} {
  func.func @kernel(%arg0: i32, %arg1: memref<8x1xf32, #tpu.memory_space<vmem>>, %arg2: memref<8x3xf32, #tpu.memory_space<vmem>>, %arg3: memref<1x32xf32, #tpu.memory_space<vmem>>, %arg4: memref<3x32xf32, #tpu.memory_space<vmem>>, %arg5: memref<1x32xf32, #tpu.memory_space<vmem>>, %arg6: memref<32x32xf32, #tpu.memory_space<vmem>>, %arg7: memref<1x32xf32, #tpu.memory_space<vmem>>, %arg8: memref<32x1xf32, #tpu.memory_space<vmem>>, %arg9: memref<1x1xf32, #tpu.memory_space<vmem>>, %arg10: memref<8x1xf32, #tpu.memory_space<vmem>>) attributes {dimension_semantics = [#tpu.dimension_semantics<parallel>], iteration_bounds = array<i64: 1>, scalar_prefetch = 0 : i64, scratch_operands = 0 : i64, tpu.core_type = #tpu.core_type<tc>, window_params = [{transform_indices = @transform_0, window_bounds = array<i64: 8, 1>}, {transform_indices = @transform_1, window_bounds = array<i64: 8, 3>}, {pipeline_mode = #tpu.pipeline_mode<synchronous>, transform_indices = @transform_2, window_bounds = array<i64: 1, 32>}, {pipeline_mode = #tpu.pipeline_mode<synchronous>, transform_indices = @transform_3, window_bounds = array<i64: 3, 32>}, {pipeline_mode = #tpu.pipeline_mode<synchronous>, transform_indices = @transform_4, window_bounds = array<i64: 1, 32>}, {pipeline_mode = #tpu.pipeline_mode<synchronous>, transform_indices = @transform_5, window_bounds = array<i64: 32, 32>}, {pipeline_mode = #tpu.pipeline_mode<synchronous>, transform_indices = @transform_6, window_bounds = array<i64: 1, 32>}, {pipeline_mode = #tpu.pipeline_mode<synchronous>, transform_indices = @transform_7, window_bounds = array<i64: 32, 1>}, {pipeline_mode = #tpu.pipeline_mode<synchronous>, transform_indices = @transform_8, window_bounds = array<i64: 1, 1>}, {transform_indices = @transform_9, window_bounds = array<i64: 8, 1>}]} {
    %c0 = arith.constant 0 : index
    %c0_0 = arith.constant 0 : index
    %0 = vector.load %arg1[%c0, %c0_0] : memref<8x1xf32, #tpu.memory_space<vmem>>, vector<8x1xf32>
    %c0_1 = arith.constant 0 : index
    %c0_2 = arith.constant 0 : index
    %1 = vector.load %arg3[%c0_1, %c0_2] : memref<1x32xf32, #tpu.memory_space<vmem>>, vector<1x32xf32>
    %cst = arith.constant dense<0.000000e+00> : vector<8x32xf32>
    %2 = tpu.matmul %0, %1, %cst {dimension_numbers = #tpu.dot_dimension_numbers<[1], [0], [0], [1], [0, 0, 1, 1], [], []>} : vector<8x1xf32>, vector<1x32xf32>, vector<8x32xf32> -> vector<8x32xf32>
    %c0_3 = arith.constant 0 : index
    %c0_4 = arith.constant 0 : index
    %3 = vector.load %arg2[%c0_3, %c0_4] : memref<8x3xf32, #tpu.memory_space<vmem>>, vector<8x3xf32>
    %c0_5 = arith.constant 0 : index
    %c0_6 = arith.constant 0 : index
    %4 = vector.load %arg4[%c0_5, %c0_6] : memref<3x32xf32, #tpu.memory_space<vmem>>, vector<3x32xf32>
    %cst_7 = arith.constant dense<0.000000e+00> : vector<8x32xf32>
    %5 = tpu.matmul %3, %4, %cst_7 {dimension_numbers = #tpu.dot_dimension_numbers<[1], [0], [0], [1], [0, 0, 1, 1], [], []>} : vector<8x3xf32>, vector<3x32xf32>, vector<8x32xf32> -> vector<8x32xf32>
    %6 = arith.addf %2, %5 : vector<8x32xf32>
    %c0_8 = arith.constant 0 : index
    %c0_9 = arith.constant 0 : index
    %7 = vector.load %arg5[%c0_8, %c0_9] : memref<1x32xf32, #tpu.memory_space<vmem>>, vector<1x32xf32>
    %8 = vector.broadcast %7 : vector<1x32xf32> to vector<8x32xf32>
    %9 = arith.addf %6, %8 : vector<8x32xf32>
    %cst_10 = arith.constant 0.000000e+00 : f32
    %10 = vector.broadcast %cst_10 : f32 to vector<8x32xf32>
    %11 = arith.maximumf %9, %10 : vector<8x32xf32>
    %c0_11 = arith.constant 0 : index
    %c0_12 = arith.constant 0 : index
    %12 = vector.load %arg6[%c0_11, %c0_12] : memref<32x32xf32, #tpu.memory_space<vmem>>, vector<32x32xf32>
    %c0_13 = arith.constant 0 : index
    %c0_14 = arith.constant 0 : index
    %13 = vector.load %arg7[%c0_13, %c0_14] : memref<1x32xf32, #tpu.memory_space<vmem>>, vector<1x32xf32>
    %cst_15 = arith.constant dense<0.000000e+00> : vector<8x32xf32>
    %14 = tpu.matmul %11, %12, %cst_15 {dimension_numbers = #tpu.dot_dimension_numbers<[1], [0], [0], [1], [0, 0, 1, 1], [], []>} : vector<8x32xf32>, vector<32x32xf32>, vector<8x32xf32> -> vector<8x32xf32>
    %15 = vector.broadcast %13 : vector<1x32xf32> to vector<8x32xf32>
    %16 = arith.addf %14, %15 : vector<8x32xf32>
    %cst_16 = arith.constant 0.000000e+00 : f32
    %17 = vector.broadcast %cst_16 : f32 to vector<8x32xf32>
    %18 = arith.maximumf %16, %17 : vector<8x32xf32>
    %c0_17 = arith.constant 0 : index
    %c0_18 = arith.constant 0 : index
    %19 = vector.load %arg8[%c0_17, %c0_18] : memref<32x1xf32, #tpu.memory_space<vmem>>, vector<32x1xf32>
    %c0_19 = arith.constant 0 : index
    %c0_20 = arith.constant 0 : index
    %20 = vector.load %arg9[%c0_19, %c0_20] : memref<1x1xf32, #tpu.memory_space<vmem>>, vector<1x1xf32>
    %cst_21 = arith.constant dense<0.000000e+00> : vector<8x1xf32>
    %21 = tpu.matmul %18, %19, %cst_21 {dimension_numbers = #tpu.dot_dimension_numbers<[1], [0], [0], [1], [0, 0, 1, 1], [], []>} : vector<8x32xf32>, vector<32x1xf32>, vector<8x1xf32> -> vector<8x1xf32>
    %22 = vector.broadcast %20 : vector<1x1xf32> to vector<8x1xf32>
    %23 = arith.addf %21, %22 : vector<8x1xf32>
    %cst_22 = arith.constant 0.000000e+00 : f32
    %24 = vector.broadcast %cst_22 : f32 to vector<8x1xf32>
    %25 = arith.cmpf ogt, %23, %24 : vector<8x1xf32>
    %cst_23 = arith.constant 1.000000e+00 : f32
    %26 = vector.broadcast %cst_23 : f32 to vector<8x1xf32>
    %27 = arith.addf %23, %26 : vector<8x1xf32>
    %28 = math.exp %23 : vector<8x1xf32>
    %29 = arith.select %25, %27, %28 : vector<8x1xi1>, vector<8x1xf32>
    %c0_24 = arith.constant 0 : index
    %c0_25 = arith.constant 0 : index
    %30 = vector.load %arg10[%c0_24, %c0_25] : memref<8x1xf32, #tpu.memory_space<vmem>>, vector<8x1xf32>
    tpu.vector_store %arg10[%c0_24, %c0_25], %29 {strides = array<i32>} : memref<8x1xf32, #tpu.memory_space<vmem>>, vector<8x1xf32>,
    return
  }
  func.func @transform_0(%arg0: i32) -> (i32, i32) {
    %c0_i32 = arith.constant 0 : i32
    %c0_i32_0 = arith.constant 0 : i32
    return %arg0, %c0_i32 : i32, i32
  }
  func.func @transform_1(%arg0: i32) -> (i32, i32) {
    %c0_i32 = arith.constant 0 : i32
    %c0_i32_0 = arith.constant 0 : i32
    return %arg0, %c0_i32 : i32, i32
  }
  func.func @transform_2(%arg0: i32) -> (i32, i32) {
    %c0_i32 = arith.constant 0 : i32
    %c0_i32_0 = arith.constant 0 : i32
    %c0_i32_1 = arith.constant 0 : i32
    return %c0_i32, %c0_i32_0 : i32, i32
  }
  func.func @transform_3(%arg0: i32) -> (i32, i32) {
    %c0_i32 = arith.constant 0 : i32
    %c0_i32_0 = arith.constant 0 : i32
    %c0_i32_1 = arith.constant 0 : i32
    return %c0_i32, %c0_i32_0 : i32, i32
  }
  func.func @transform_4(%arg0: i32) -> (i32, i32) {
    %c0_i32 = arith.constant 0 : i32
    %c0_i32_0 = arith.constant 0 : i32
    %c0_i32_1 = arith.constant 0 : i32
    return %c0_i32, %c0_i32_0 : i32, i32
  }
  func.func @transform_5(%arg0: i32) -> (i32, i32) {
    %c0_i32 = arith.constant 0 : i32
    %c0_i32_0 = arith.constant 0 : i32
    %c0_i32_1 = arith.constant 0 : i32
    return %c0_i32, %c0_i32_0 : i32, i32
  }
  func.func @transform_6(%arg0: i32) -> (i32, i32) {
    %c0_i32 = arith.constant 0 : i32
    %c0_i32_0 = arith.constant 0 : i32
    %c0_i32_1 = arith.constant 0 : i32
    return %c0_i32, %c0_i32_0 : i32, i32
  }
  func.func @transform_7(%arg0: i32) -> (i32, i32) {
    %c0_i32 = arith.constant 0 : i32
    %c0_i32_0 = arith.constant 0 : i32
    %c0_i32_1 = arith.constant 0 : i32
    return %c0_i32, %c0_i32_0 : i32, i32
  }
  func.func @transform_8(%arg0: i32) -> (i32, i32) {
    %c0_i32 = arith.constant 0 : i32
    %c0_i32_0 = arith.constant 0 : i32
    %c0_i32_1 = arith.constant 0 : i32
    return %c0_i32, %c0_i32_0 : i32, i32
  }
  func.func @transform_9(%arg0: i32) -> (i32, i32) {
    %c0_i32 = arith.constant 0 : i32
    %c0_i32_0 = arith.constant 0 : i32
    return %arg0, %c0_i32 : i32, i32
  }
}

</mosaic_0001>

<llo_original>
// kernel: _integrand_pallas.1
$region0: #{_integrand_pallas.1}
  #allocation0 [shape = 'u32[]', space=smem, size = 0x4, offset = 0x4, fixed_abs, tag = 'smem constant byte address 0x4 - core index']
  #allocation1 [shape = 'u32[72,128]{1,0:T(1,128)}', space=vmem, size = 0x9000, scoped, tag = 'internal scratch']
  #allocation2 [shape = 'f32[1,1]{1,0:T(1,128)S(1)}', space=vmem, size = 0x200, scoped, tag = 'scoped memory for _integrand_pallas.1']
  %s0 = inlined_call_operand.vmem [shape: f32[8,1], index: 0, kind: input, shape index: {}]
  %s1 = inlined_call_operand.vmem [shape: f32[8,3], index: 1, kind: input, shape index: {}]
  %s2 = inlined_call_operand.vmem [shape: f32[1,32], index: 2, kind: input, shape index: {}]
  %s3 = inlined_call_operand.vmem [shape: f32[3,32], index: 3, kind: input, shape index: {}]
  %s4 = inlined_call_operand.vmem [shape: f32[1,32], index: 4, kind: input, shape index: {}]
  %s5 = inlined_call_operand.vmem [shape: f32[32,32], index: 5, kind: input, shape index: {}]
  %s6 = inlined_call_operand.vmem [shape: f32[1,32], index: 6, kind: input, shape index: {}]
  %s7 = inlined_call_operand.vmem [shape: f32[32,1], index: 7, kind: input, shape index: {}]
  %s8 = inlined_call_operand.<no memory space> [shape: f32[1,1], index: 8, kind: input, shape index: {}]
  %s9 = inlined_call_operand.vmem [shape: f32[8,1], index: 9, kind: output, shape index: {}]
  %s10 = sld [smem:[#allocation0]]
  $region46: #{_integrand_pallas.1} parent=0
    _
  %s12 = ssub.s32 1, %s10
  %s13 = scalar_select 0, %s12, %s10
  %v14 = vstv %s8
  %15 = vst [vmem:[#allocation2] sm:$0x1] %v14
  // Predicated region
  $region2: #{_integrand_pallas.1} parent=0 // pred_check
    _
  $region3: #{_integrand_pallas.1} parent=0 // pred_check_branch
    %17 = sbr.rel (0) target = $region5
  $region4: #{_integrand_pallas.1} parent=0 // pred_region
    _
  $region5: #{_integrand_pallas.1} parent=0 // pred_fallthru
    _
  // Predicated region
  $region6: #{_integrand_pallas.1} parent=0 // pred_check
    _
  $region7: #{_integrand_pallas.1} parent=0 // pred_check_branch
    %19 = sbr.rel (0) target = $region9
  $region8: #{_integrand_pallas.1} parent=0 // pred_region
    _
  $region9: #{_integrand_pallas.1} parent=0 // pred_fallthru
    _
  // Predicated region
  $region10: #{_integrand_pallas.1} parent=0 // pred_check
    _
  $region11: #{_integrand_pallas.1} parent=0 // pred_check_branch
    %21 = sbr.rel (0) target = $region13
  $region12: #{_integrand_pallas.1} parent=0 // pred_region
    _
  $region13: #{_integrand_pallas.1} parent=0 // pred_fallthru
    _
  // Predicated region
  $region14: #{_integrand_pallas.1} parent=0 // pred_check
    _
  $region15: #{_integrand_pallas.1} parent=0 // pred_check_branch
    %23 = sbr.rel (0) target = $region17
  $region16: #{_integrand_pallas.1} parent=0 // pred_region
    _
  $region17: #{_integrand_pallas.1} parent=0 // pred_fallthru
    _
  // Predicated region
  $region18: #{_integrand_pallas.1} parent=0 // pred_check
    _
  $region19: #{_integrand_pallas.1} parent=0 // pred_check_branch
    %25 = sbr.rel (0) target = $region21
  $region20: #{_integrand_pallas.1} parent=0 // pred_region
    _
  $region21: #{_integrand_pallas.1} parent=0 // pred_fallthru
    _
  // Predicated region
  $region22: #{_integrand_pallas.1} parent=0 // pred_check
    _
  $region23: #{_integrand_pallas.1} parent=0 // pred_check_branch
    %27 = sbr.rel (0) target = $region25
  $region24: #{_integrand_pallas.1} parent=0 // pred_region
    _
  $region25: #{_integrand_pallas.1} parent=0 // pred_fallthru
    _
  // Predicated region
  $region26: #{_integrand_pallas.1} parent=0 // pred_check
    _
  $region27: #{_integrand_pallas.1} parent=0 // pred_check_branch
    %29 = sbr.rel (0) target = $region29
  $region28: #{_integrand_pallas.1} parent=0 // pred_region
    _
  $region29: #{_integrand_pallas.1} parent=0 // pred_fallthru
    _
  // Predicated region
  $region30: #{_integrand_pallas.1} parent=0 // pred_check
    _
  $region31: #{_integrand_pallas.1} parent=0 // pred_check_branch
    %31 = sbr.rel (0) target = $region33
  $region32: #{_integrand_pallas.1} parent=0 // pred_region
    _
  $region33: #{_integrand_pallas.1} parent=0 // pred_fallthru
    _
  // Predicated region
  $region34: #{_integrand_pallas.1} parent=0 // pred_check
    _
  $region35: #{_integrand_pallas.1} parent=0 // pred_check_branch
    %33 = sbr.rel (0) target = $region37
  $region36: #{_integrand_pallas.1} parent=0 // pred_region
    _
  $region37: #{_integrand_pallas.1} parent=0 // pred_fallthru
    _
  %v34 = vld [vmem:[%s0] sm:$0xff]
  %v35 = vld [vmem:[%s2] sm:$0x1]
  %v36 = vld [vmem:[%s1] sm:$0xff]
  %v37 = vld [vmem:[%s3] sm:$0x7]
  %vm38 = vcmask 23552
  %v40 = vsel %vm38, %v36, 0
  %vm42 = vcmask 1042432
  %v44 = vsel %vm42, %v37, 0
  %46 = vmatpush.msra.mxu0 0.0
  %47 = vmatpush.msra.mxu0 0.0
  %48 = vmatpush.msra.mxu0 0.0
  %49 = vmatpush.msra.mxu0 0.0
  %50 = vmatpush.msra.mxu0 0.0
  %51 = vmatpush.msra.mxu0 0.0
  %52 = vmatpush.msra.mxu0 0.0
  %53 = vmatpush.msra.mxu0 0.0
  %54 = vmatpush.msra.mxu0 0.0
  %55 = vmatpush.msra.mxu0 0.0
  %56 = vmatpush.msra.mxu0 0.0
  %57 = vmatpush.msra.mxu0 0.0
  %58 = vmatpush.msra.mxu0 0.0
  %59 = vmatpush.msra.mxu0 0.0
  %60 = vmatpush.msra.mxu0 0.0
  %61 = vmatpush.msra.mxu0 %v44
  %62 = vmatmul.f32.gmra.mxu0 %v40
  %v63 = vpop.f32.mrf.mxu0
  %v64 = vadd.f32 0.0, %v63
  %65 = vdwg.mxu0
  %vm66 = vcmask 7168
  %v68 = vsel %vm66, %v34, 0
  %vm70 = vcmask 1040384
  %v72 = vsel %vm70, %v35, 0
  %74 = vmatpush.msra.mxu0 0.0
  %75 = vmatpush.msra.mxu0 0.0
  %76 = vmatpush.msra.mxu0 0.0
  %77 = vmatpush.msra.mxu0 0.0
  %78 = vmatpush.msra.mxu0 0.0
  %79 = vmatpush.msra.mxu0 0.0
  %80 = vmatpush.msra.mxu0 0.0
  %81 = vmatpush.msra.mxu0 0.0
  %82 = vmatpush.msra.mxu0 0.0
  %83 = vmatpush.msra.mxu0 0.0
  %84 = vmatpush.msra.mxu0 0.0
  %85 = vmatpush.msra.mxu0 0.0
  %86 = vmatpush.msra.mxu0 0.0
  %87 = vmatpush.msra.mxu0 0.0
  %88 = vmatpush.msra.mxu0 0.0
  %89 = vmatpush.msra.mxu0 %v72
  %90 = vmatmul.f32.gmra.mxu0 %v68
  %v91 = vpop.f32.mrf.mxu0
  %v92 = vadd.f32 %v64, %v91
  %93 = vdwg.mxu0
  %v94 = vld [vmem:[%s4] sm:$0x1]
  %v96 = vperm.slane %v94, 0
  %v98 = vadd.f32 %v92, %v96
  %v99 = vmax.f32 %v98, 0.0
  %v100 = vld [vmem:[%s5] sm:$0xff]
  %v101 = vld [vmem:[%s5 + $0x8] sm:$0xff]
  %v102 = vld [vmem:[%s5 + $0x10] sm:$0xff]
  %v103 = vld [vmem:[%s5 + $0x18] sm:$0xff]
  %v104 = vld [vmem:[%s6] sm:$0x1]
  %v106 = vperm.slane %v104, 0
  %vm108 = vcmask 261120
  %v110 = vsel %vm108, %v99, 0
  %112 = vmatpush.msra.mxu0 0.0
  %113 = vmatpush.msra.mxu0 0.0
  %114 = vmatpush.msra.mxu0 0.0
  %115 = vmatpush.msra.mxu0 0.0
  %116 = vmatpush.msra.mxu0 0.0
  %117 = vmatpush.msra.mxu0 0.0
  %118 = vmatpush.msra.mxu0 0.0
  %119 = vmatpush.msra.mxu0 0.0
  %120 = vmatpush.msra.mxu0 0.0
  %121 = vmatpush.msra.mxu0 0.0
  %122 = vmatpush.msra.mxu0 0.0
  %123 = vmatpush.msra.mxu0 0.0
  %124 = vmatpush.msra.mxu0 %v103
  %125 = vmatpush.msra.mxu0 %v102
  %126 = vmatpush.msra.mxu0 %v101
  %127 = vmatpush.msra.mxu0 %v100
  %128 = vmatmul.f32.gmra.mxu0 %v110
  %v129 = vpop.f32.mrf.mxu0
  %v130 = vadd.f32 %v106, %v129
  %131 = vdwg.mxu0
  %v132 = vmax.f32 %v130, 0.0
  %v133 = vld [vmem:[%s7] sm:$0xff]
  %v134 = vld [vmem:[%s7 + $0x8] sm:$0xff]
  %v135 = vld [vmem:[%s7 + $0x10] sm:$0xff]
  %v136 = vld [vmem:[%s7 + $0x18] sm:$0xff]
  %v137 = vld [vmem:[#allocation2] sm:$0x1]
  %v139 = vperm.slane %v137, 0
  %v142 = vsel %vm108, %v132, 0
  %144 = vmatpush.msra.mxu0 0.0
  %145 = vmatpush.msra.mxu0 0.0
  %146 = vmatpush.msra.mxu0 0.0
  %147 = vmatpush.msra.mxu0 0.0
  %148 = vmatpush.msra.mxu0 0.0
  %149 = vmatpush.msra.mxu0 0.0
  %150 = vmatpush.msra.mxu0 0.0
  %151 = vmatpush.msra.mxu0 0.0
  %152 = vmatpush.msra.mxu0 0.0
  %153 = vmatpush.msra.mxu0 0.0
  %154 = vmatpush.msra.mxu0 0.0
  %155 = vmatpush.msra.mxu0 0.0
  %156 = vmatpush.msra.mxu0 %v136
  %157 = vmatpush.msra.mxu0 %v135
  %158 = vmatpush.msra.mxu0 %v134
  %159 = vmatpush.msra.mxu0 %v133
  %160 = vmatmul.f32.gmra.mxu0 %v142
  %v161 = vpop.f32.mrf.mxu0
  %v162 = vadd.f32 %v139, %v161
  %163 = vdwg.mxu0
  %vm164 = vcmp.gt.f32.partialorder %v162, 0.0
  %v165 = vadd.f32 %v162, 1.0
  %v166 = vmul.f32 %v162, 1.442695
  %v167 = vpow.pop %v166
  %v168 = vsel %vm164, %v165, %v167
  %169 = vst.msk [vmem:[%s9] sm:$0xff] %vm66, %v168
  // Predicated region
  $region38: #{_integrand_pallas.1} parent=0 // pred_check
    _
  $region39: #{_integrand_pallas.1} parent=0 // pred_check_branch
    %171 = sbr.rel (0) target = $region41
  $region40: #{_integrand_pallas.1} parent=0 // pred_region
    _
  $region41: #{_integrand_pallas.1} parent=0 // pred_fallthru
    _
  // Predicated region
  $region42: #{_integrand_pallas.1} parent=0 // pred_check
    _
  $region43: #{_integrand_pallas.1} parent=0 // pred_check_branch
    %173 = sbr.rel (0) target = $region45
  $region44: #{_integrand_pallas.1} parent=0 // pred_region
    _
  $region45: #{_integrand_pallas.1} parent=0 // pred_fallthru
    _

</llo_original>
